<compile_context>
chip_gen: v7x
topology: tpu7x:2x2x1
jax: 0.10.0
libtpu: 0.0.40
codegen_flags: <defaults>
</compile_context>

<pallas_src>
import functools

import jax
import jax.numpy as jnp
from jax.experimental import pallas as pl
from jax.experimental.pallas import tpu as pltpu

PAD = 128      # padded width of the hidden/weight tiles (lane-dense)
HIDDEN = 64    # true hidden width of the original module


def _round_up(x, m):
    return ((x + m - 1) // m) * m


def actor_kernel(obs_ref, w_ref, b_ref, out_ref, *, k1, dim_action):
    """obs_ref: (tb, k1) f32; w_ref: (4, 128, 128) matmul dtype;
    b_ref: (8, 128) f32 (rows 0..3 used); out_ref: (tb, dim_action) f32.
    k1 = round_up(dim_observation, 8) = real contraction width of FC1."""
    cdt = w_ref.dtype  # MXU input dtype (bf16 by default; f32 for the check path)

    x = obs_ref[...].astype(cdt)                                       # (tb, k1)
    # FC1 + ReLU — contract against the first k1 (zero-padded) rows of W1.
    h = jnp.dot(x, w_ref[0, :k1, :], preferred_element_type=jnp.float32)
    h = jnp.maximum(h + b_ref[0:1, :], 0.0)
    # FC2 + ReLU
    h = jnp.dot(h.astype(cdt), w_ref[1], preferred_element_type=jnp.float32)
    h = jnp.maximum(h + b_ref[1:2, :], 0.0)
    # FC3 + ReLU
    h = jnp.dot(h.astype(cdt), w_ref[2], preferred_element_type=jnp.float32)
    h = jnp.maximum(h + b_ref[2:3, :], 0.0)
    # FC4 + (tanh(.) + 1) * 1.5 — epilogue only on the real action lanes.
    h = jnp.dot(h.astype(cdt), w_ref[3], preferred_element_type=jnp.float32)
    b4 = b_ref[3:4, :]                                                 # (1, 128)
    z = h[:, :dim_action] + b4[:, :dim_action]
    out_ref[...] = ((jnp.tanh(z) + 1.0) * 1.5).astype(out_ref.dtype)


def pack_actor_params(params, matmul_dtype=jnp.bfloat16):
    """Pack the 4 weights into one zero-padded (4,128,128) slab (matmul dtype)
    and the 4 biases into one zero-padded (8,128) f32 slab."""
    def pad_w(w):
        out = jnp.zeros((PAD, PAD), jnp.float32)
        return out.at[: w.shape[0], : w.shape[1]].set(w)

    w_all = jnp.stack(
        [pad_w(params["w1"]), pad_w(params["w2"]),
         pad_w(params["w3"]), pad_w(params["w4"])], axis=0
    ).astype(matmul_dtype)

    b_all = jnp.zeros((8, PAD), jnp.float32)
    for i, name in enumerate(("b1", "b2", "b3", "b4")):
        b = params[name].reshape(-1)
        b_all = b_all.at[i, : b.shape[0]].set(b)
    return w_all, b_all


def actor_forward(obs, w_all, b_all, dim_action, *, block_b=1024):
    """obs: (B, dim_observation) f32. Returns (B, dim_action) f32."""
    B, dim_obs = obs.shape

    # FC1 contraction width: round up to a sublane multiple only if needed
    # (tiny pad; skipped entirely when dim_obs is already 8-aligned).
    k1 = _round_up(dim_obs, 8)
    if k1 != dim_obs:
        obs = jnp.pad(obs, ((0, 0), (0, k1 - dim_obs)))

    # Batch tile: multiple of 8, capped at block_b.  On v7x (2 TensorCores) make
    # sure the "parallel" grid has >= 2 steps when there is enough work to split.
    b8 = _round_up(B, 8)
    tb = min(_round_up(block_b, 8), b8)
    if b8 // tb < 2 and b8 >= 16:
        tb = _round_up(pl.cdiv(b8, 2), 8)
    grid = (pl.cdiv(B, tb),)

    cost = pl.CostEstimate(
        flops=2 * B * (k1 * PAD + 3 * PAD * PAD),
        transcendentals=B * dim_action,
        bytes_accessed=(B * (k1 + dim_action) * 4
                        + w_all.size * w_all.dtype.itemsize
                        + b_all.size * 4),
    )

    kernel = functools.partial(actor_kernel, k1=k1, dim_action=dim_action)
    return pl.pallas_call(
        kernel,
        out_shape=jax.ShapeDtypeStruct((B, dim_action), jnp.float32),
        grid=grid,
        in_specs=[
            pl.BlockSpec((tb, k1), lambda i: (i, 0)),          # obs tiles pipeline
            pl.BlockSpec((4, PAD, PAD), lambda i: (0, 0, 0)),  # weights: VMEM-resident
            pl.BlockSpec((8, PAD), lambda i: (0, 0)),          # biases: VMEM-resident
        ],
        out_specs=pl.BlockSpec((tb, dim_action), lambda i: (i, 0)),
        compiler_params=pltpu.CompilerParams(
            dimension_semantics=("parallel",)),  # shard batch tiles across TCs (v7x)
        cost_estimate=cost,
    )(obs, w_all, b_all)


def init_actor_params(key, dim_observation, dim_action):
    """PyTorch nn.Linear-style init U(-1/sqrt(fan_in), 1/sqrt(fan_in)).
    Weights stored (in, out); biases stored (1, out)."""
    dims = [(dim_observation, HIDDEN), (HIDDEN, HIDDEN),
            (HIDDEN, HIDDEN), (HIDDEN, dim_action)]
    params = {}
    keys = jax.random.split(key, 2 * len(dims))
    for i, (fan_in, fan_out) in enumerate(dims):
        bound = 1.0 / jnp.sqrt(jnp.float32(fan_in))
        params[f"w{i + 1}"] = jax.random.uniform(
            keys[2 * i], (fan_in, fan_out), minval=-bound, maxval=bound,
            dtype=jnp.float32)
        params[f"b{i + 1}"] = jax.random.uniform(
            keys[2 * i + 1], (1, fan_out), minval=-bound, maxval=bound,
            dtype=jnp.float32)
    return params


def actor_reference(obs, params):
    dot = functools.partial(jnp.dot, precision=jax.lax.Precision.HIGHEST)
    h = jnp.maximum(dot(obs, params["w1"]) + params["b1"], 0.0)
    h = jnp.maximum(dot(h, params["w2"]) + params["b2"], 0.0)
    h = jnp.maximum(dot(h, params["w3"]) + params["b3"], 0.0)
    return (jnp.tanh(dot(h, params["w4"]) + params["b4"]) + 1.0) * 1.5


if __name__ == "__main__":
    key = jax.random.PRNGKey(0)
    k_params, k_obs, k_obs_big = jax.random.split(key, 3)

    batch = 8
    dim_observation = 16
    dim_action = 4

    params = init_actor_params(k_params, dim_observation, dim_action)
    obs = jax.random.normal(k_obs, (batch, dim_observation), dtype=jnp.float32)
    ref = actor_reference(obs, params)

    # f32 matmul-input path: close to the PyTorch f32 semantics (MXU still
    # emulates f32 internally, so not bit-true).
    w_f32, b_f32 = pack_actor_params(params, matmul_dtype=jnp.float32)
    out_f32 = jax.block_until_ready(actor_forward(obs, w_f32, b_f32, dim_action))
    assert out_f32.shape == (batch, dim_action)
    assert jnp.allclose(out_f32, ref, atol=1e-4, rtol=1e-4), "f32 path mismatch"

    # bf16-input matmul path (production default; single MXU pass, f32 accum).
    w_bf16, b_bf16 = pack_actor_params(params)
    out_bf16 = jax.block_until_ready(actor_forward(obs, w_bf16, b_bf16, dim_action))
    assert out_bf16.shape == (batch, dim_action)
    assert jnp.allclose(out_bf16, ref, atol=5e-2, rtol=5e-2), "bf16 path mismatch"

    # Larger, non-multiple-of-tile batch: exercises the 2-way core split with a
    # ragged (masked) last tile on the default tile size ...
    big = 1000
    obs_big = jax.random.normal(k_obs_big, (big, dim_observation), dtype=jnp.float32)
    ref_big = actor_reference(obs_big, params)
    out_big = jax.block_until_ready(
        actor_forward(obs_big, w_bf16, b_bf16, dim_action))
    assert out_big.shape == (big, dim_action)
    assert jnp.allclose(out_big, ref_big, atol=5e-2, rtol=5e-2), "big-batch mismatch"

    # ... and a many-step pipelined grid with a small tile.
    out_small_tile = jax.block_until_ready(
        actor_forward(obs_big, w_bf16, b_bf16, dim_action, block_b=128))
    assert jnp.allclose(out_small_tile, ref_big, atol=5e-2, rtol=5e-2), \
        "small-tile mismatch"

    print("KERNEL_OK")
</pallas_src>

<mosaic_0001>
module attributes {stable_mosaic.version = 11 : i64} {
  func.func @actor_kernel(%arg0: i32, %arg1: memref<8x16xf32, #tpu.memory_space<vmem>>, %arg2: memref<4x128x128xf32, #tpu.memory_space<vmem>>, %arg3: memref<8x128xf32, #tpu.memory_space<vmem>>, %arg4: memref<8x4xf32, #tpu.memory_space<vmem>>) attributes {dimension_semantics = [#tpu.dimension_semantics<parallel>], iteration_bounds = array<i64: 1>, scalar_prefetch = 0 : i64, scratch_operands = 0 : i64, tpu.core_type = #tpu.core_type<tc>, window_params = [{transform_indices = @transform_0, window_bounds = array<i64: 8, 16>}, {pipeline_mode = #tpu.pipeline_mode<synchronous>, transform_indices = @transform_1, window_bounds = array<i64: 4, 128, 128>}, {pipeline_mode = #tpu.pipeline_mode<synchronous>, transform_indices = @transform_2, window_bounds = array<i64: 8, 128>}, {transform_indices = @transform_3, window_bounds = array<i64: 8, 4>}]} {
    %c0 = arith.constant 0 : index
    %c0_0 = arith.constant 0 : index
    %0 = vector.load %arg1[%c0, %c0_0] : memref<8x16xf32, #tpu.memory_space<vmem>>, vector<8x16xf32>
    %c0_1 = arith.constant 0 : index
    %c0_2 = arith.constant 0 : index
    %c0_3 = arith.constant 0 : index
    %1 = vector.load %arg2[%c0_1, %c0_2, %c0_3] : memref<4x128x128xf32, #tpu.memory_space<vmem>>, vector<1x16x128xf32>
    %2 = vector.shape_cast %1 : vector<1x16x128xf32> to vector<16x128xf32>
    %cst = arith.constant dense<0.000000e+00> : vector<8x128xf32>
    %3 = tpu.matmul %0, %2, %cst {dimension_numbers = #tpu.dot_dimension_numbers<[1], [0], [0], [1], [0, 0, 1, 1], [], []>} : vector<8x16xf32>, vector<16x128xf32>, vector<8x128xf32> -> vector<8x128xf32>
    %c0_4 = arith.constant 0 : index
    %c0_5 = arith.constant 0 : index
    %4 = vector.load %arg3[%c0_4, %c0_5] : memref<8x128xf32, #tpu.memory_space<vmem>>, vector<1x128xf32>
    %5 = vector.broadcast %4 : vector<1x128xf32> to vector<8x128xf32>
    %6 = arith.addf %3, %5 : vector<8x128xf32>
    %cst_6 = arith.constant 0.000000e+00 : f32
    %7 = vector.broadcast %cst_6 : f32 to vector<8x128xf32>
    %8 = arith.maximumf %6, %7 : vector<8x128xf32>
    %c1 = arith.constant 1 : index
    %c0_7 = arith.constant 0 : index
    %c0_8 = arith.constant 0 : index
    %9 = vector.load %arg2[%c1, %c0_7, %c0_8] : memref<4x128x128xf32, #tpu.memory_space<vmem>>, vector<1x128x128xf32>
    %10 = vector.shape_cast %9 : vector<1x128x128xf32> to vector<128x128xf32>
    %cst_9 = arith.constant dense<0.000000e+00> : vector<8x128xf32>
    %11 = tpu.matmul %8, %10, %cst_9 {dimension_numbers = #tpu.dot_dimension_numbers<[1], [0], [0], [1], [0, 0, 1, 1], [], []>} : vector<8x128xf32>, vector<128x128xf32>, vector<8x128xf32> -> vector<8x128xf32>
    %c1_10 = arith.constant 1 : index
    %c0_11 = arith.constant 0 : index
    %12 = vector.load %arg3[%c1_10, %c0_11] : memref<8x128xf32, #tpu.memory_space<vmem>>, vector<1x128xf32>
    %13 = vector.broadcast %12 : vector<1x128xf32> to vector<8x128xf32>
    %14 = arith.addf %11, %13 : vector<8x128xf32>
    %cst_12 = arith.constant 0.000000e+00 : f32
    %15 = vector.broadcast %cst_12 : f32 to vector<8x128xf32>
    %16 = arith.maximumf %14, %15 : vector<8x128xf32>
    %c2 = arith.constant 2 : index
    %c0_13 = arith.constant 0 : index
    %c0_14 = arith.constant 0 : index
    %17 = vector.load %arg2[%c2, %c0_13, %c0_14] : memref<4x128x128xf32, #tpu.memory_space<vmem>>, vector<1x128x128xf32>
    %18 = vector.shape_cast %17 : vector<1x128x128xf32> to vector<128x128xf32>
    %cst_15 = arith.constant dense<0.000000e+00> : vector<8x128xf32>
    %19 = tpu.matmul %16, %18, %cst_15 {dimension_numbers = #tpu.dot_dimension_numbers<[1], [0], [0], [1], [0, 0, 1, 1], [], []>} : vector<8x128xf32>, vector<128x128xf32>, vector<8x128xf32> -> vector<8x128xf32>
    %c2_16 = arith.constant 2 : index
    %c0_17 = arith.constant 0 : index
    %20 = vector.load %arg3[%c2_16, %c0_17] : memref<8x128xf32, #tpu.memory_space<vmem>>, vector<1x128xf32>
    %21 = vector.broadcast %20 : vector<1x128xf32> to vector<8x128xf32>
    %22 = arith.addf %19, %21 : vector<8x128xf32>
    %cst_18 = arith.constant 0.000000e+00 : f32
    %23 = vector.broadcast %cst_18 : f32 to vector<8x128xf32>
    %24 = arith.maximumf %22, %23 : vector<8x128xf32>
    %c3 = arith.constant 3 : index
    %c0_19 = arith.constant 0 : index
    %c0_20 = arith.constant 0 : index
    %25 = vector.load %arg2[%c3, %c0_19, %c0_20] : memref<4x128x128xf32, #tpu.memory_space<vmem>>, vector<1x128x128xf32>
    %26 = vector.shape_cast %25 : vector<1x128x128xf32> to vector<128x128xf32>
    %cst_21 = arith.constant dense<0.000000e+00> : vector<8x128xf32>
    %27 = tpu.matmul %24, %26, %cst_21 {dimension_numbers = #tpu.dot_dimension_numbers<[1], [0], [0], [1], [0, 0, 1, 1], [], []>} : vector<8x128xf32>, vector<128x128xf32>, vector<8x128xf32> -> vector<8x128xf32>
    %c3_22 = arith.constant 3 : index
    %c0_23 = arith.constant 0 : index
    %28 = vector.load %arg3[%c3_22, %c0_23] : memref<8x128xf32, #tpu.memory_space<vmem>>, vector<1x128xf32>
    %29 = vector.extract_strided_slice %27 {offsets = [0, 0], sizes = [8, 4], strides = [1, 1]} : vector<8x128xf32> to vector<8x4xf32>
    %30 = vector.extract_strided_slice %28 {offsets = [0, 0], sizes = [1, 4], strides = [1, 1]} : vector<1x128xf32> to vector<1x4xf32>
    %31 = vector.broadcast %30 : vector<1x4xf32> to vector<8x4xf32>
    %32 = arith.addf %29, %31 : vector<8x4xf32>
    %33 = math.tanh %32 : vector<8x4xf32>
    %cst_24 = arith.constant 1.000000e+00 : f32
    %34 = vector.broadcast %cst_24 : f32 to vector<8x4xf32>
    %35 = arith.addf %33, %34 : vector<8x4xf32>
    %cst_25 = arith.constant 1.500000e+00 : f32
    %36 = vector.broadcast %cst_25 : f32 to vector<8x4xf32>
    %37 = arith.mulf %35, %36 : vector<8x4xf32>
    %c0_26 = arith.constant 0 : index
    %c0_27 = arith.constant 0 : index
    %38 = vector.load %arg4[%c0_26, %c0_27] : memref<8x4xf32, #tpu.memory_space<vmem>>, vector<8x4xf32>
    tpu.vector_store %arg4[%c0_26, %c0_27], %37 {strides = array<i32>} : memref<8x4xf32, #tpu.memory_space<vmem>>, vector<8x4xf32>,
    return
  }
  func.func @transform_0(%arg0: i32) -> (i32, i32) {
    %c0_i32 = arith.constant 0 : i32
    %c0_i32_0 = arith.constant 0 : i32
    return %arg0, %c0_i32 : i32, i32
  }
  func.func @transform_1(%arg0: i32) -> (i32, i32, i32) {
    %c0_i32 = arith.constant 0 : i32
    %c0_i32_0 = arith.constant 0 : i32
    %c0_i32_1 = arith.constant 0 : i32
    %c0_i32_2 = arith.constant 0 : i32
    return %c0_i32, %c0_i32_0, %c0_i32_1 : i32, i32, i32
  }
  func.func @transform_2(%arg0: i32) -> (i32, i32) {
    %c0_i32 = arith.constant 0 : i32
    %c0_i32_0 = arith.constant 0 : i32
    %c0_i32_1 = arith.constant 0 : i32
    return %c0_i32, %c0_i32_0 : i32, i32
  }
  func.func @transform_3(%arg0: i32) -> (i32, i32) {
    %c0_i32 = arith.constant 0 : i32
    %c0_i32_0 = arith.constant 0 : i32
    return %arg0, %c0_i32 : i32, i32
  }
}

</mosaic_0001>

<llo_original>
// kernel: tpu_custom_call.1
$region0: #{tpu_custom_call.1}
  #allocation0 [shape = 'u32[]', space=smem, size = 0x4, offset = 0x4, fixed_abs, tag = 'smem constant byte address 0x4 - core index']
  #allocation1 [shape = 'u32[144,128]{1,0:T(1,128)}', space=vmem, size = 0x12000, scoped, tag = 'internal scratch']
  %s0 = inlined_call_operand.hbm [shape: f32[8,16], index: 0, kind: input, shape index: {}]
  %s1 = inlined_call_operand.hbm [shape: f32[4,128,128], index: 1, kind: input, shape index: {}]
  %s2 = inlined_call_operand.hbm [shape: f32[8,128], index: 2, kind: input, shape index: {}]
  %s3 = inlined_call_operand.vmem [shape: f32[8,4], index: 3, kind: output, shape index: {}]
  %s4 = sld [smem:[#allocation0]]
  $region34: #{tpu_custom_call.1} parent=0
    _
  %s6 = ssub.s32 1, %s4
  %s7 = scalar_select 0, %s6, %s4
  $region1: #{tpu_custom_call.1} parent=0
    #allocation2 [shape = 'u8[4096]{0}', space=vmem, size = 0x1000, scoped, tag = 'input window, operand 0, single buffered']
    #allocation3 [shape = 's32[1]{0}', space=sflag, size = 0x4, scoped, tag = 'scoped memory for tpu_custom_call.1']
    #allocation4 [shape = 'u8[262144]{0}', space=vmem, size = 0x40000, scoped, tag = 'input window, operand 1, single buffered']
    #allocation5 [shape = 's32[1]{0}', space=sflag, size = 0x4, scoped, tag = 'scoped memory for tpu_custom_call.1']
    #allocation6 [shape = 'u8[4096]{0}', space=vmem, size = 0x1000, scoped, tag = 'input window, operand 2, single buffered']
    %8 = vsyncpa [#allocation3], 0
    %9 = vsyncpa [#allocation5], 0
    // Predicated region
    $region2: #{tpu_custom_call.1} parent=1 // pred_check
      _
    $region3: #{tpu_custom_call.1} parent=1 // pred_check_branch
      %11 = sbr.rel (0) target = $region5
    $region4: #{tpu_custom_call.1} parent=1 // pred_region
      %s13 = ssub.s32 128, 128
      %14 = vsyncadd [#allocation3], %s13
      %s16 = sshll.u32 [#allocation2], 4
      %s17 = int_to_ptr.vmem [resolvable:$true] %s16
      %19 = dma.hbm_to_vmem [thread:$0]  %s0, 128, %s17, [#allocation3]
    $region5: #{tpu_custom_call.1} parent=1 // pred_fallthru
      _
    // Predicated region
    $region6: #{tpu_custom_call.1} parent=1 // pred_check
      _
    $region7: #{tpu_custom_call.1} parent=1 // pred_check_branch
      %21 = sbr.rel (0) target = $region9
    $region8: #{tpu_custom_call.1} parent=1 // pred_region
      %s23 = ssub.s32 8192, 8192
      %24 = vsyncadd [#allocation5], %s23
      %s25 = sshll.u32 [#allocation4], 4
      %s26 = int_to_ptr.vmem [resolvable:$true] %s25
      %31 = dma.hbm_to_vmem [thread:$0]  %s1, 8192, %s26, [#allocation5], 128, 128, 8
    $region9: #{tpu_custom_call.1} parent=1 // pred_fallthru
      _
    // Predicated region
    $region10: #{tpu_custom_call.1} parent=1 // pred_check
      _
    $region11: #{tpu_custom_call.1} parent=1 // pred_check_branch
      %33 = sbr.rel (0) target = $region13
    $region12: #{tpu_custom_call.1} parent=1 // pred_region
      %s35 = ssub.s32 128, 128
      %36 = vsyncadd [#allocation5], %s35
      %s38 = sshll.u32 [#allocation6], 4
      %s39 = int_to_ptr.vmem [resolvable:$true] %s38
      %41 = dma.hbm_to_vmem [thread:$0]  %s2, 128, %s39, [#allocation5]
    $region13: #{tpu_custom_call.1} parent=1 // pred_fallthru
      _
    // Predicated region
    $region14: #{tpu_custom_call.1} parent=1 // pred_check
      _
    $region15: #{tpu_custom_call.1} parent=1 // pred_check_branch
      %43 = sbr.rel (0) target = $region17
    $region16: #{tpu_custom_call.1} parent=1 // pred_region
      %44 = dma.done [#allocation3], 128
    $region17: #{tpu_custom_call.1} parent=1 // pred_fallthru
      _
    // Predicated region
    $region18: #{tpu_custom_call.1} parent=1 // pred_check
      _
    $region19: #{tpu_custom_call.1} parent=1 // pred_check_branch
      %46 = sbr.rel (0) target = $region21
    $region20: #{tpu_custom_call.1} parent=1 // pred_region
      %47 = dma.done [#allocation5], 8192
    $region21: #{tpu_custom_call.1} parent=1 // pred_fallthru
      _
    // Predicated region
    $region22: #{tpu_custom_call.1} parent=1 // pred_check
      _
    $region23: #{tpu_custom_call.1} parent=1 // pred_check_branch
      %49 = sbr.rel (0) target = $region25
    $region24: #{tpu_custom_call.1} parent=1 // pred_region
      %50 = dma.done [#allocation5], 128
    $region25: #{tpu_custom_call.1} parent=1 // pred_fallthru
      _
    %v51 = vld [vmem:[#allocation2] sm:$0xff]
    %v52 = vld [vmem:[#allocation4] sm:$0xff]
    %v53 = vld [vmem:[#allocation4 + $0x8] sm:$0xff]
    %v54 = vld [vmem:[#allocation6] sm:$0x1]
    %v55 = vlaneseq
    %v56 = vshrl.u32 %v55, 7
    %v57 = vsub.s32 0, %v56
    %v58 = vrot.slane %v54, %v57
    %vm59 = vcmask 130048
    %v61 = vsel %vm59, %v51, 0
    %63 = vmatprep.subr.mxu0 0.0
    %64 = vmatpush1.msra.mxu0 %v52
    %65 = vmatprep.subr.mxu0 0.0
    %66 = vmatpush1.msra.mxu0 %v53
    %67 = vmatprep.subr.mxu0 0.0
    %68 = vmatpush1.msra.mxu0 0.0
    %69 = vmatprep.subr.mxu0 0.0
    %70 = vmatpush1.msra.mxu0 0.0
    %71 = vmatprep.subr.mxu0 0.0
    %72 = vmatpush1.msra.mxu0 0.0
    %73 = vmatprep.subr.mxu0 0.0
    %74 = vmatpush1.msra.mxu0 0.0
    %75 = vmatprep.subr.mxu0 0.0
    %76 = vmatpush1.msra.mxu0 0.0
    %77 = vmatprep.subr.mxu0 0.0
    %78 = vmatpush1.msra.mxu0 0.0
    %79 = vmatprep.subr.mxu0 0.0
    %80 = vmatpush1.msra.mxu0 0.0
    %81 = vmatprep.subr.mxu0 0.0
    %82 = vmatpush1.msra.mxu0 0.0
    %83 = vmatprep.subr.mxu0 0.0
    %84 = vmatpush1.msra.mxu0 0.0
    %85 = vmatprep.subr.mxu0 0.0
    %86 = vmatpush1.msra.mxu0 0.0
    %87 = vmatprep.subr.mxu0 0.0
    %88 = vmatpush1.msra.mxu0 0.0
    %89 = vmatprep.subr.mxu0 0.0
    %90 = vmatpush1.msra.mxu0 0.0
    %91 = vmatprep.subr.mxu0 0.0
    %92 = vmatpush1.msra.mxu0 0.0
    %93 = vmatprep.subr.mxu0 0.0
    %94 = vmatpush1.msra.mxu0 0.0
    %95 = vmatprep.subr.mxu0 0.0
    %96 = vmatpush1.msra.mxu0 0.0
    %97 = vmatprep.subr.mxu0 0.0
    %98 = vmatpush1.msra.mxu0 0.0
    %99 = vmatprep.subr.mxu0 0.0
    %100 = vmatpush1.msra.mxu0 0.0
    %101 = vmatprep.subr.mxu0 0.0
    %102 = vmatpush1.msra.mxu0 0.0
    %103 = vmatprep.subr.mxu0 0.0
    %104 = vmatpush1.msra.mxu0 0.0
    %105 = vmatprep.subr.mxu0 0.0
    %106 = vmatpush1.msra.mxu0 0.0
    %107 = vmatprep.subr.mxu0 0.0
    %108 = vmatpush1.msra.mxu0 0.0
    %109 = vmatprep.subr.mxu0 0.0
    %110 = vmatpush1.msra.mxu0 0.0
    %111 = vmatprep.subr.mxu0 0.0
    %112 = vmatpush1.msra.mxu0 0.0
    %113 = vmatprep.subr.mxu0 0.0
    %114 = vmatpush1.msra.mxu0 0.0
    %115 = vmatprep.subr.mxu0 0.0
    %116 = vmatpush1.msra.mxu0 0.0
    %117 = vmatprep.subr.mxu0 0.0
    %118 = vmatpush1.msra.mxu0 0.0
    %119 = vmatprep.subr.mxu0 0.0
    %120 = vmatpush1.msra.mxu0 0.0
    %121 = vmatprep.subr.mxu0 0.0
    %122 = vmatpush1.msra.mxu0 0.0
    %123 = vmatprep.subr.mxu0 0.0
    %124 = vmatpush1.msra.mxu0 0.0
    %125 = vmatprep.subr.mxu0 0.0
    %126 = vmatpush1.msra.mxu0 0.0
    %127 = vmatprep.mubr.f32.mxu0 0.0
    %128 = vmatmul.mubr.f32.gmra.mrb[0].mxu0 %v61
    %v129 = vpop.f32.mrb[0].mxu0
    %v130 = vadd.f32 %v58, %v129
    %v131 = vpop.f32.mrb[0].mxu0
    %132 = vdwg.mxu0
    %v133 = vmax.f32 %v130, 0.0
    %s134 = scalar_lea.vmem [#allocation4], 128
    %v135 = vld [vmem:[%s134] sm:$0xff]
    %v136 = vld [vmem:[%s134 + $0x8] sm:$0xff]
    %v137 = vld [vmem:[%s134 + $0x10] sm:$0xff]
    %v138 = vld [vmem:[%s134 + $0x18] sm:$0xff]
    %v139 = vld [vmem:[%s134 + $0x20] sm:$0xff]
    %v140 = vld [vmem:[%s134 + $0x28] sm:$0xff]
    %v141 = vld [vmem:[%s134 + $0x30] sm:$0xff]
    %v142 = vld [vmem:[%s134 + $0x38] sm:$0xff]
    %v143 = vld [vmem:[%s134 + $0x40] sm:$0xff]
    %v144 = vld [vmem:[%s134 + $0x48] sm:$0xff]
    %v145 = vld [vmem:[%s134 + $0x50] sm:$0xff]
    %v146 = vld [vmem:[%s134 + $0x58] sm:$0xff]
    %v147 = vld [vmem:[%s134 + $0x60] sm:$0xff]
    %v148 = vld [vmem:[%s134 + $0x68] sm:$0xff]
    %v149 = vld [vmem:[%s134 + $0x70] sm:$0xff]
    %v150 = vld [vmem:[%s134 + $0x78] sm:$0xff]
    %v151 = vld [vmem:[#allocation6 + $0x1] sm:$0x1]
    %v152 = vlaneseq
    %v153 = vshrl.u32 %v152, 7
    %v154 = vsub.s32 0, %v153
    %v155 = vrot.slane %v151, %v154
    %156 = vmatprep.subr.mxu0 0.0
    %157 = vmatpush1.msra.mxu0 %v135
    %158 = vmatprep.subr.mxu0 0.0
    %159 = vmatpush1.msra.mxu0 %v136
    %160 = vmatprep.subr.mxu0 0.0
    %161 = vmatpush1.msra.mxu0 %v137
    %162 = vmatprep.subr.mxu0 0.0
    %163 = vmatpush1.msra.mxu0 %v138
    %164 = vmatprep.subr.mxu0 0.0
    %165 = vmatpush1.msra.mxu0 %v139
    %166 = vmatprep.subr.mxu0 0.0
    %167 = vmatpush1.msra.mxu0 %v140
    %168 = vmatprep.subr.mxu0 0.0
    %169 = vmatpush1.msra.mxu0 %v141
    %170 = vmatprep.subr.mxu0 0.0
    %171 = vmatpush1.msra.mxu0 %v142
    %172 = vmatprep.subr.mxu0 0.0
    %173 = vmatpush1.msra.mxu0 %v143
    %174 = vmatprep.subr.mxu0 0.0
    %175 = vmatpush1.msra.mxu0 %v144
    %176 = vmatprep.subr.mxu0 0.0
    %177 = vmatpush1.msra.mxu0 %v145
    %178 = vmatprep.subr.mxu0 0.0
    %179 = vmatpush1.msra.mxu0 %v146
    %180 = vmatprep.subr.mxu0 0.0
    %181 = vmatpush1.msra.mxu0 %v147
    %182 = vmatprep.subr.mxu0 0.0
    %183 = vmatpush1.msra.mxu0 %v148
    %184 = vmatprep.subr.mxu0 0.0
    %185 = vmatpush1.msra.mxu0 %v149
    %186 = vmatprep.subr.mxu0 0.0
    %187 = vmatpush1.msra.mxu0 %v150
    %188 = vmatprep.subr.mxu0 0.0
    %189 = vmatpush1.msra.mxu0 0.0
    %190 = vmatprep.subr.mxu0 0.0
    %191 = vmatpush1.msra.mxu0 0.0
    %192 = vmatprep.subr.mxu0 0.0
    %193 = vmatpush1.msra.mxu0 0.0
    %194 = vmatprep.subr.mxu0 0.0
    %195 = vmatpush1.msra.mxu0 0.0
    %196 = vmatprep.subr.mxu0 0.0
    %197 = vmatpush1.msra.mxu0 0.0
    %198 = vmatprep.subr.mxu0 0.0
    %199 = vmatpush1.msra.mxu0 0.0
    %200 = vmatprep.subr.mxu0 0.0
    %201 = vmatpush1.msra.mxu0 0.0
    %202 = vmatprep.subr.mxu0 0.0
    %203 = vmatpush1.msra.mxu0 0.0
    %204 = vmatprep.subr.mxu0 0.0
    %205 = vmatpush1.msra.mxu0 0.0
    %206 = vmatprep.subr.mxu0 0.0
    %207 = vmatpush1.msra.mxu0 0.0
    %208 = vmatprep.subr.mxu0 0.0
    %209 = vmatpush1.msra.mxu0 0.0
    %210 = vmatprep.subr.mxu0 0.0
    %211 = vmatpush1.msra.mxu0 0.0
    %212 = vmatprep.subr.mxu0 0.0
    %213 = vmatpush1.msra.mxu0 0.0
    %214 = vmatprep.subr.mxu0 0.0
    %215 = vmatpush1.msra.mxu0 0.0
    %216 = vmatprep.subr.mxu0 0.0
    %217 = vmatpush1.msra.mxu0 0.0
    %218 = vmatprep.subr.mxu0 0.0
    %219 = vmatpush1.msra.mxu0 0.0
    %220 = vmatprep.mubr.f32.mxu0 0.0
    %221 = vmatmul.mubr.f32.gmra.mrb[0].mxu0 %v133
    %v222 = vpop.f32.mrb[0].mxu0
    %v223 = vadd.f32 %v155, %v222
    %v224 = vpop.f32.mrb[0].mxu0
    %225 = vdwg.mxu0
    %v226 = vmax.f32 %v223, 0.0
    %s227 = scalar_lea.vmem [#allocation4], 256
    %v228 = vld [vmem:[%s227] sm:$0xff]
    %v229 = vld [vmem:[%s227 + $0x8] sm:$0xff]
    %v230 = vld [vmem:[%s227 + $0x10] sm:$0xff]
    %v231 = vld [vmem:[%s227 + $0x18] sm:$0xff]
    %v232 = vld [vmem:[%s227 + $0x20] sm:$0xff]
    %v233 = vld [vmem:[%s227 + $0x28] sm:$0xff]
    %v234 = vld [vmem:[%s227 + $0x30] sm:$0xff]
    %v235 = vld [vmem:[%s227 + $0x38] sm:$0xff]
    %v236 = vld [vmem:[%s227 + $0x40] sm:$0xff]
    %v237 = vld [vmem:[%s227 + $0x48] sm:$0xff]
    %v238 = vld [vmem:[%s227 + $0x50] sm:$0xff]
    %v239 = vld [vmem:[%s227 + $0x58] sm:$0xff]
    %v240 = vld [vmem:[%s227 + $0x60] sm:$0xff]
    %v241 = vld [vmem:[%s227 + $0x68] sm:$0xff]
    %v242 = vld [vmem:[%s227 + $0x70] sm:$0xff]
    %v243 = vld [vmem:[%s227 + $0x78] sm:$0xff]
    %v244 = vld [vmem:[#allocation6 + $0x2] sm:$0x1]
    %v245 = vlaneseq
    %v246 = vshrl.u32 %v245, 7
    %v247 = vsub.s32 0, %v246
    %v248 = vrot.slane %v244, %v247
    %249 = vmatprep.subr.mxu0 0.0
    %250 = vmatpush1.msra.mxu0 %v228
    %251 = vmatprep.subr.mxu0 0.0
    %252 = vmatpush1.msra.mxu0 %v229
    %253 = vmatprep.subr.mxu0 0.0
    %254 = vmatpush1.msra.mxu0 %v230
    %255 = vmatprep.subr.mxu0 0.0
    %256 = vmatpush1.msra.mxu0 %v231
    %257 = vmatprep.subr.mxu0 0.0
    %258 = vmatpush1.msra.mxu0 %v232
    %259 = vmatprep.subr.mxu0 0.0
    %260 = vmatpush1.msra.mxu0 %v233
    %261 = vmatprep.subr.mxu0 0.0
    %262 = vmatpush1.msra.mxu0 %v234
    %263 = vmatprep.subr.mxu0 0.0
    %264 = vmatpush1.msra.mxu0 %v235
    %265 = vmatprep.subr.mxu0 0.0
    %266 = vmatpush1.msra.mxu0 %v236
    %267 = vmatprep.subr.mxu0 0.0
    %268 = vmatpush1.msra.mxu0 %v237
    %269 = vmatprep.subr.mxu0 0.0
    %270 = vmatpush1.msra.mxu0 %v238
    %271 = vmatprep.subr.mxu0 0.0
    %272 = vmatpush1.msra.mxu0 %v239
    %273 = vmatprep.subr.mxu0 0.0
    %274 = vmatpush1.msra.mxu0 %v240
    %275 = vmatprep.subr.mxu0 0.0
    %276 = vmatpush1.msra.mxu0 %v241
    %277 = vmatprep.subr.mxu0 0.0
    %278 = vmatpush1.msra.mxu0 %v242
    %279 = vmatprep.subr.mxu0 0.0
    %280 = vmatpush1.msra.mxu0 %v243
    %281 = vmatprep.subr.mxu0 0.0
    %282 = vmatpush1.msra.mxu0 0.0
    %283 = vmatprep.subr.mxu0 0.0
    %284 = vmatpush1.msra.mxu0 0.0
    %285 = vmatprep.subr.mxu0 0.0
    %286 = vmatpush1.msra.mxu0 0.0
    %287 = vmatprep.subr.mxu0 0.0
    %288 = vmatpush1.msra.mxu0 0.0
    %289 = vmatprep.subr.mxu0 0.0
    %290 = vmatpush1.msra.mxu0 0.0
    %291 = vmatprep.subr.mxu0 0.0
    %292 = vmatpush1.msra.mxu0 0.0
    %293 = vmatprep.subr.mxu0 0.0
    %294 = vmatpush1.msra.mxu0 0.0
    %295 = vmatprep.subr.mxu0 0.0
    %296 = vmatpush1.msra.mxu0 0.0
    %297 = vmatprep.subr.mxu0 0.0
    %298 = vmatpush1.msra.mxu0 0.0
    %299 = vmatprep.subr.mxu0 0.0
    %300 = vmatpush1.msra.mxu0 0.0
    %301 = vmatprep.subr.mxu0 0.0
    %302 = vmatpush1.msra.mxu0 0.0
    %303 = vmatprep.subr.mxu0 0.0
    %304 = vmatpush1.msra.mxu0 0.0
    %305 = vmatprep.subr.mxu0 0.0
    %306 = vmatpush1.msra.mxu0 0.0
    %307 = vmatprep.subr.mxu0 0.0
    %308 = vmatpush1.msra.mxu0 0.0
    %309 = vmatprep.subr.mxu0 0.0
    %310 = vmatpush1.msra.mxu0 0.0
    %311 = vmatprep.subr.mxu0 0.0
    %312 = vmatpush1.msra.mxu0 0.0
    %313 = vmatprep.mubr.f32.mxu0 0.0
    %314 = vmatmul.mubr.f32.gmra.mrb[0].mxu0 %v226
    %v315 = vpop.f32.mrb[0].mxu0
    %v316 = vadd.f32 %v248, %v315
    %v317 = vpop.f32.mrb[0].mxu0
    %318 = vdwg.mxu0
    %v319 = vmax.f32 %v316, 0.0
    %s320 = scalar_lea.vmem [#allocation4], 384
    %v321 = vld [vmem:[%s320] sm:$0xff]
    %v322 = vld [vmem:[%s320 + $0x8] sm:$0xff]
    %v323 = vld [vmem:[%s320 + $0x10] sm:$0xff]
    %v324 = vld [vmem:[%s320 + $0x18] sm:$0xff]
    %v325 = vld [vmem:[%s320 + $0x20] sm:$0xff]
    %v326 = vld [vmem:[%s320 + $0x28] sm:$0xff]
    %v327 = vld [vmem:[%s320 + $0x30] sm:$0xff]
    %v328 = vld [vmem:[%s320 + $0x38] sm:$0xff]
    %v329 = vld [vmem:[%s320 + $0x40] sm:$0xff]
    %v330 = vld [vmem:[%s320 + $0x48] sm:$0xff]
    %v331 = vld [vmem:[%s320 + $0x50] sm:$0xff]
    %v332 = vld [vmem:[%s320 + $0x58] sm:$0xff]
    %v333 = vld [vmem:[%s320 + $0x60] sm:$0xff]
    %v334 = vld [vmem:[%s320 + $0x68] sm:$0xff]
    %v335 = vld [vmem:[%s320 + $0x70] sm:$0xff]
    %v336 = vld [vmem:[%s320 + $0x78] sm:$0xff]
    %337 = vmatprep.subr.mxu0 0.0
    %338 = vmatpush1.msra.mxu0 %v321
    %339 = vmatprep.subr.mxu0 0.0
    %340 = vmatpush1.msra.mxu0 %v322
    %341 = vmatprep.subr.mxu0 0.0
    %342 = vmatpush1.msra.mxu0 %v323
    %343 = vmatprep.subr.mxu0 0.0
    %344 = vmatpush1.msra.mxu0 %v324
    %345 = vmatprep.subr.mxu0 0.0
    %346 = vmatpush1.msra.mxu0 %v325
    %347 = vmatprep.subr.mxu0 0.0
    %348 = vmatpush1.msra.mxu0 %v326
    %349 = vmatprep.subr.mxu0 0.0
    %350 = vmatpush1.msra.mxu0 %v327
    %351 = vmatprep.subr.mxu0 0.0
    %352 = vmatpush1.msra.mxu0 %v328
    %353 = vmatprep.subr.mxu0 0.0
    %354 = vmatpush1.msra.mxu0 %v329
    %355 = vmatprep.subr.mxu0 0.0
    %356 = vmatpush1.msra.mxu0 %v330
    %357 = vmatprep.subr.mxu0 0.0
    %358 = vmatpush1.msra.mxu0 %v331
    %359 = vmatprep.subr.mxu0 0.0
    %360 = vmatpush1.msra.mxu0 %v332
    %361 = vmatprep.subr.mxu0 0.0
    %362 = vmatpush1.msra.mxu0 %v333
    %363 = vmatprep.subr.mxu0 0.0
    %364 = vmatpush1.msra.mxu0 %v334
    %365 = vmatprep.subr.mxu0 0.0
    %366 = vmatpush1.msra.mxu0 %v335
    %367 = vmatprep.subr.mxu0 0.0
    %368 = vmatpush1.msra.mxu0 %v336
    %369 = vmatprep.subr.mxu0 0.0
    %370 = vmatpush1.msra.mxu0 0.0
    %371 = vmatprep.subr.mxu0 0.0
    %372 = vmatpush1.msra.mxu0 0.0
    %373 = vmatprep.subr.mxu0 0.0
    %374 = vmatpush1.msra.mxu0 0.0
    %375 = vmatprep.subr.mxu0 0.0
    %376 = vmatpush1.msra.mxu0 0.0
    %377 = vmatprep.subr.mxu0 0.0
    %378 = vmatpush1.msra.mxu0 0.0
    %379 = vmatprep.subr.mxu0 0.0
    %380 = vmatpush1.msra.mxu0 0.0
    %381 = vmatprep.subr.mxu0 0.0
    %382 = vmatpush1.msra.mxu0 0.0
    %383 = vmatprep.subr.mxu0 0.0
    %384 = vmatpush1.msra.mxu0 0.0
    %385 = vmatprep.subr.mxu0 0.0
    %386 = vmatpush1.msra.mxu0 0.0
    %387 = vmatprep.subr.mxu0 0.0
    %388 = vmatpush1.msra.mxu0 0.0
    %389 = vmatprep.subr.mxu0 0.0
    %390 = vmatpush1.msra.mxu0 0.0
    %391 = vmatprep.subr.mxu0 0.0
    %392 = vmatpush1.msra.mxu0 0.0
    %393 = vmatprep.subr.mxu0 0.0
    %394 = vmatpush1.msra.mxu0 0.0
    %395 = vmatprep.subr.mxu0 0.0
    %396 = vmatpush1.msra.mxu0 0.0
    %397 = vmatprep.subr.mxu0 0.0
    %398 = vmatpush1.msra.mxu0 0.0
    %399 = vmatprep.subr.mxu0 0.0
    %400 = vmatpush1.msra.mxu0 0.0
    %401 = vmatprep.mubr.f32.mxu0 0.0
    %402 = vmatmul.mubr.f32.gmra.mrb[0].mxu0 %v319
    %v403 = vpop.f32.mrb[0].mxu0
    %v404 = vadd.f32 0.0, %v403
    %v405 = vpop.f32.mrb[0].mxu0
    %406 = vdwg.mxu0
    %v407 = vld [vmem:[#allocation6 + $0x3] sm:$0x1]
    %v408 = vlaneseq
    %v409 = vshrl.u32 %v408, 7
    %v410 = vsub.s32 0, %v409
    %v411 = vrot.slane %v407, %v410
    %v412 = vadd.f32 %v404, %v411
    %v413 = vtanh.pop %v412
    %v414 = vadd.f32 %v413, 1.0
    %v415 = vmul.f32 %v414, 1.5
    %vm416 = vcmask 31744
    %417 = vst.msk [vmem:[%s3] sm:$0xff] %vm416, %v415
    // Predicated region
    $region26: #{tpu_custom_call.1} parent=1 // pred_check
      _
    $region27: #{tpu_custom_call.1} parent=1 // pred_check_branch
      %419 = sbr.rel (0) target = $region29
    $region28: #{tpu_custom_call.1} parent=1 // pred_region
      _
    $region29: #{tpu_custom_call.1} parent=1 // pred_fallthru
      _
    // Predicated region
    $region30: #{tpu_custom_call.1} parent=1 // pred_check
      _
    $region31: #{tpu_custom_call.1} parent=1 // pred_check_branch
      %421 = sbr.rel (0) target = $region33
    $region32: #{tpu_custom_call.1} parent=1 // pred_region
      _
    $region33: #{tpu_custom_call.1} parent=1 // pred_fallthru
      _
    %422 = vsyncpa [#allocation3], 1
    %423 = vsyncpa [#allocation5], 1

</llo_original>
